<compile_context>
chip_gen: v7x
topology: tpu7x:2x2x1
jax: 0.10.0
libtpu: 0.0.40
codegen_flags: <defaults>
</compile_context>

<pallas_src>
import functools

import jax
import jax.numpy as jnp
from jax.experimental import pallas as pl
from jax.experimental.pallas import tpu as pltpu


# ----------------------------- kernels ------------------------------------ #

def _bn_stats_kernel(x_ref, sum_ref, sq_ref, *, tr, n_rows, tiles_per_core):
    """Pass 1 of bn1d: per-channel sum and sum-of-squares.

    x_ref: (tr, D) row tile (last tile may be partial -> masked below).
    sum_ref / sq_ref: (8, D) f32 accumulator block, one per stats core,
    resident across the inner ("arbitrary") grid axis.
    """
    c = pl.program_id(0)
    i = pl.program_id(1)

    @pl.when(i == 0)
    def _():
        sum_ref[...] = jnp.zeros_like(sum_ref)
        sq_ref[...] = jnp.zeros_like(sq_ref)

    # Global tile index / row offset.  The index_map clamps the DMA to the
    # last valid tile; this (unclamped) offset drives the mask so any rows
    # outside the real array contribute exactly zero.
    t = c * tiles_per_core + i
    row0 = t * tr

    x = x_ref[...].astype(jnp.float32)
    rows = jax.lax.broadcasted_iota(jnp.int32, (tr, 1), 0) + row0
    x = jnp.where(rows < n_rows, x, 0.0)

    sum_ref[0:1, :] += jnp.sum(x, axis=0, keepdims=True)
    sq_ref[0:1, :] += jnp.sum(x * x, axis=0, keepdims=True)


def _bn_apply_kernel(x_ref, s_ref, sq_ref, gamma_ref, beta_ref, o_ref, *,
                     n_rows, eps):
    """Pass 2 of bn1d with the finalize fused in: y = x * scale + shift.

    s_ref / sq_ref: (stats_cores*8, D) partial sums from pass 1 (resident).
    The (1, D) finalize is recomputed every grid step: O(D) work vs O(tr*D)
    tile work, so it is free for this HBM-bound kernel and needs no
    cross-core scratch (correct under megacore "parallel" sharding).
    """
    s = jnp.sum(s_ref[...], axis=0, keepdims=True)
    sq = jnp.sum(sq_ref[...], axis=0, keepdims=True)
    inv_n = 1.0 / float(n_rows)
    mean = s * inv_n
    # TODO(synk): E[x^2]-E[x]^2 can cancel for very large B*P with large
    # means; switch to a centered two-pass accumulation for tight tolerances.
    var = jnp.maximum(sq * inv_n - mean * mean, 0.0)
    inv = jax.lax.rsqrt(var + eps)
    scale = gamma_ref[...] * inv
    shift = beta_ref[...] - mean * scale

    x = x_ref[...].astype(jnp.float32)
    o_ref[...] = (x * scale + shift).astype(o_ref.dtype)


def _ln_kernel(x_ref, gamma_ref, beta_ref, o_ref, *, eps):
    """LayerNorm over the last dim for a (tr, D) row tile."""
    x = x_ref[...].astype(jnp.float32)
    inv_d = 1.0 / float(x.shape[-1])
    mean = jnp.sum(x, axis=-1, keepdims=True) * inv_d
    xc = x - mean
    var = jnp.sum(xc * xc, axis=-1, keepdims=True) * inv_d
    inv = jax.lax.rsqrt(var + eps)
    o_ref[...] = (xc * inv * gamma_ref[...] + beta_ref[...]).astype(o_ref.dtype)


# ----------------------------- wrapper ------------------------------------ #

def _hw_params():
    """(row-tile byte target, vmem_limit_bytes or None, stats cores)."""
    try:
        kind = jax.devices()[0].device_kind.lower()
    except Exception:
        kind = ""
    if "v7" in kind:
        # 64 MiB physical VMEM: keep ~4*tile + resident vectors <= ~48 MiB.
        return 8 << 20, 48 << 20, 2
    if "v6" in kind:
        return 8 << 20, 96 << 20, 1
    if "v5p" in kind or "v4" in kind:
        return 6 << 20, 64 << 20, 2          # megacore: 2 TCs
    if "v5" in kind:                          # v5e / v5 lite
        return 4 << 20, 48 << 20, 1
    return 2 << 20, None, 1                   # unknown: conservative defaults


def _choose_row_tile(n_rows, d, itemsize, target_bytes, row_tile=None):
    """Row tile: ~target_bytes per tile, rounded to the dtype-native sublane
    multiple (8 f32 / 16 bf16 / 32 int8), capped by the row count."""
    sub = max(8, 32 // max(1, itemsize))
    tr = row_tile if row_tile is not None else target_bytes // max(1, d * itemsize)
    tr = min(tr, 8192)
    tr = max(sub, (tr // sub) * sub)
    n_ceil = -(-n_rows // sub) * sub
    tr = min(tr, n_ceil)
    if n_rows < tr and n_rows < 8:
        # Block 2nd-minor dim must be a multiple of 8 or equal the full dim.
        tr = n_rows
    return max(1, tr)


def patch_norm(x, gamma, beta, *, norm_type="bn1d", eps=1e-5,
               row_tile=None, stats_cores=None):
    """Pallas equivalent of patch_norm.forward.

    x:     (B, P, D)
    gamma: (D,) scale (BatchNorm weight / LayerNorm weight)
    beta:  (D,) shift (BatchNorm bias   / LayerNorm bias)
    """
    if norm_type not in ("bn1d", "ln"):
        raise ValueError("norm_type should be bn1d or ln")

    b, p, d = x.shape
    n = b * p
    x2 = x.reshape(n, d)

    target_bytes, vmem_limit, hw_cores = _hw_params()
    itemsize = jnp.dtype(x.dtype).itemsize
    tr = _choose_row_tile(n, d, itemsize, target_bytes, row_tile)
    n_tiles = pl.cdiv(n, tr)

    gamma2 = gamma.reshape(1, d).astype(jnp.float32)
    beta2 = beta.reshape(1, d).astype(jnp.float32)

    row_spec = pl.BlockSpec((tr, d), lambda i: (i, 0))
    # Per-channel vectors: same block every step -> resident, DMA'd once.
    vec_spec = pl.BlockSpec((1, d), lambda i: (0, 0))

    extra = {"vmem_limit_bytes": vmem_limit} if vmem_limit else {}

    if norm_type == "bn1d":
        c_cores = stats_cores if stats_cores is not None else hw_cores
        c_cores = max(1, min(int(c_cores), n_tiles))
        tiles_per_core = pl.cdiv(n_tiles, c_cores)

        def stat_x_map(c, i):
            # Clamp to the last valid tile; excess iterations of the last core
            # are fully masked inside the kernel.
            return (jnp.minimum(c * tiles_per_core + i, n_tiles - 1), 0)

        acc_spec = pl.BlockSpec((8, d), lambda c, i: (c, 0))

        s_part, sq_part = pl.pallas_call(
            functools.partial(_bn_stats_kernel, tr=tr, n_rows=n,
                              tiles_per_core=tiles_per_core),
            out_shape=(jax.ShapeDtypeStruct((c_cores * 8, d), jnp.float32),
                       jax.ShapeDtypeStruct((c_cores * 8, d), jnp.float32)),
            grid=(c_cores, tiles_per_core),
            in_specs=[pl.BlockSpec((tr, d), stat_x_map)],
            out_specs=(acc_spec, acc_spec),
            compiler_params=pltpu.CompilerParams(
                dimension_semantics=("parallel", "arbitrary"), **extra),
        )(x2)

        stats_spec = pl.BlockSpec((c_cores * 8, d), lambda i: (0, 0))
        out = pl.pallas_call(
            functools.partial(_bn_apply_kernel, n_rows=n, eps=eps),
            out_shape=jax.ShapeDtypeStruct((n, d), x.dtype),
            grid=(n_tiles,),
            in_specs=[row_spec, stats_spec, stats_spec, vec_spec, vec_spec],
            out_specs=row_spec,
            compiler_params=pltpu.CompilerParams(
                dimension_semantics=("parallel",), **extra),
        )(x2, s_part, sq_part, gamma2, beta2)
    else:  # 'ln'
        out = pl.pallas_call(
            functools.partial(_ln_kernel, eps=eps),
            out_shape=jax.ShapeDtypeStruct((n, d), x.dtype),
            grid=(n_tiles,),
            in_specs=[row_spec, vec_spec, vec_spec],
            out_specs=row_spec,
            compiler_params=pltpu.CompilerParams(
                dimension_semantics=("parallel",), **extra),
        )(x2, gamma2, beta2)

    return out.reshape(b, p, d)


# --------------------------- reference (JAX) ------------------------------ #

def _ref(x, gamma, beta, *, norm_type="bn1d", eps=1e-5):
    xf = x.astype(jnp.float32)
    if norm_type == "bn1d":
        mean = jnp.mean(xf, axis=(0, 1), keepdims=True)
        var = jnp.mean((xf - mean) ** 2, axis=(0, 1), keepdims=True)
    else:
        mean = jnp.mean(xf, axis=-1, keepdims=True)
        var = jnp.mean((xf - mean) ** 2, axis=-1, keepdims=True)
    return (xf - mean) / jnp.sqrt(var + eps) * gamma + beta


# ------------------------------- main -------------------------------------- #

if __name__ == "__main__":
    key = jax.random.PRNGKey(0)
    kx, kg, kb, kx2 = jax.random.split(key, 4)

    B, P, D = 2, 8, 32  # batch, num patches, d_model (small synthetic shapes)
    x = jax.random.normal(kx, (B, P, D), dtype=jnp.float32)
    gamma = 1.0 + 0.1 * jax.random.normal(kg, (D,), dtype=jnp.float32)
    beta = 0.1 * jax.random.normal(kb, (D,), dtype=jnp.float32)

    # bn1d (module default) — default tiling and forced multi-tile path.
    ref_bn = _ref(x, gamma, beta, norm_type="bn1d")
    out_bn = patch_norm(x, gamma, beta, norm_type="bn1d")
    jax.block_until_ready(out_bn)
    assert jnp.allclose(out_bn, ref_bn, atol=1e-5, rtol=1e-5), "bn1d mismatch"
    out_bn_t = patch_norm(x, gamma, beta, norm_type="bn1d", row_tile=8)
    jax.block_until_ready(out_bn_t)
    assert jnp.allclose(out_bn_t, ref_bn, atol=1e-5, rtol=1e-5), "bn1d tiled mismatch"

    # bn1d with the stats pass explicitly split across 2 (virtual) cores —
    # exercises the clamped-index / multi-block accumulator path everywhere.
    out_bn_c = patch_norm(x, gamma, beta, norm_type="bn1d", row_tile=8,
                          stats_cores=2)
    jax.block_until_ready(out_bn_c)
    assert jnp.allclose(out_bn_c, ref_bn, atol=1e-5, rtol=1e-5), "bn1d 2-core mismatch"

    # ln (alternate config of the same module).
    ref_ln = _ref(x, gamma, beta, norm_type="ln")
    out_ln = patch_norm(x, gamma, beta, norm_type="ln")
    jax.block_until_ready(out_ln)
    assert jnp.allclose(out_ln, ref_ln, atol=1e-5, rtol=1e-5), "ln mismatch"

    # Ragged row count (exercises the mask / partial-block path, no padding).
    x_r = jax.random.normal(kx2, (2, 7, D), dtype=jnp.float32)
    out_bn_r = patch_norm(x_r, gamma, beta, norm_type="bn1d", row_tile=8,
                          stats_cores=2)
    jax.block_until_ready(out_bn_r)
    assert jnp.allclose(out_bn_r, _ref(x_r, gamma, beta, norm_type="bn1d"),
                        atol=1e-5, rtol=1e-5), "bn1d ragged mismatch"
    out_ln_r = patch_norm(x_r, gamma, beta, norm_type="ln", row_tile=8)
    jax.block_until_ready(out_ln_r)
    assert jnp.allclose(out_ln_r, _ref(x_r, gamma, beta, norm_type="ln"),
                        atol=1e-5, rtol=1e-5), "ln ragged mismatch"

    # bf16 activations (common ViT case): exercises the 16-row sublane tiling.
    x_bf = x.astype(jnp.bfloat16)
    out_bf = patch_norm(x_bf, gamma, beta, norm_type="bn1d")
    jax.block_until_ready(out_bf)
    assert jnp.allclose(out_bf.astype(jnp.float32),
                        _ref(x_bf, gamma, beta, norm_type="bn1d"),
                        atol=1e-1, rtol=5e-2), "bn1d bf16 mismatch"

    print("KERNEL_OK")
</pallas_src>

<mosaic_0001>
module attributes {stable_mosaic.version = 11 : i64} {
  func.func @_bn_stats_kernel(%arg0: i32, %arg1: i32, %arg2: memref<16x32xf32, #tpu.memory_space<vmem>>, %arg3: memref<8x32xf32, #tpu.memory_space<vmem>>, %arg4: memref<8x32xf32, #tpu.memory_space<vmem>>) attributes {dimension_semantics = [#tpu.dimension_semantics<parallel>, #tpu.dimension_semantics<arbitrary>], iteration_bounds = array<i64: 1, 1>, scalar_prefetch = 0 : i64, scratch_operands = 0 : i64, tpu.core_type = #tpu.core_type<tc>, window_params = [{transform_indices = @transform_0, window_bounds = array<i64: 16, 32>}, {transform_indices = @transform_1, window_bounds = array<i64: 8, 32>}, {transform_indices = @transform_2, window_bounds = array<i64: 8, 32>}]} {
    %c0_i32 = arith.constant 0 : i32
    %0 = arith.cmpi eq, %arg1, %c0_i32 : i32
    %1 = arith.extui %0 : i1 to i32
    %c0_i32_0 = arith.constant 0 : i32
    %2 = arith.cmpi ne, %1, %c0_i32_0 : i32
    scf.if %2 {
      %cst_13 = arith.constant 0.000000e+00 : f32
      %27 = vector.broadcast %cst_13 : f32 to vector<8x32xf32>
      %c0_14 = arith.constant 0 : index
      %c0_15 = arith.constant 0 : index
      %28 = vector.load %arg3[%c0_14, %c0_15] : memref<8x32xf32, #tpu.memory_space<vmem>>, vector<8x32xf32>
      tpu.vector_store %arg3[%c0_14, %c0_15], %27 {strides = array<i32>} : memref<8x32xf32, #tpu.memory_space<vmem>>, vector<8x32xf32>,
      %cst_16 = arith.constant 0.000000e+00 : f32
      %29 = vector.broadcast %cst_16 : f32 to vector<8x32xf32>
      %c0_17 = arith.constant 0 : index
      %c0_18 = arith.constant 0 : index
      %30 = vector.load %arg4[%c0_17, %c0_18] : memref<8x32xf32, #tpu.memory_space<vmem>>, vector<8x32xf32>
      tpu.vector_store %arg4[%c0_17, %c0_18], %29 {strides = array<i32>} : memref<8x32xf32, #tpu.memory_space<vmem>>, vector<8x32xf32>,
    } else {
    }
    %c1_i32 = arith.constant 1 : i32
    %3 = arith.muli %arg0, %c1_i32 : i32
    %4 = arith.addi %3, %arg1 : i32
    %c16_i32 = arith.constant 16 : i32
    %5 = arith.muli %4, %c16_i32 : i32
    %c0 = arith.constant 0 : index
    %c0_1 = arith.constant 0 : index
    %6 = vector.load %arg2[%c0, %c0_1] : memref<16x32xf32, #tpu.memory_space<vmem>>, vector<16x32xf32>
    %7 = tpu.iota {dimensions = array<i32: 0>} : vector<16x1xi32>
    %8 = vector.broadcast %5 : i32 to vector<16x1xi32>
    %9 = arith.addi %7, %8 : vector<16x1xi32>
    %c16_i32_2 = arith.constant 16 : i32
    %10 = vector.broadcast %c16_i32_2 : i32 to vector<16x1xi32>
    %11 = arith.cmpi slt, %9, %10 : vector<16x1xi32>
    %cst = arith.constant 0.000000e+00 : f32
    %12 = vector.shape_cast %11 : vector<16x1xi1> to vector<16x1xi1>
    %13 = vector.broadcast %12 : vector<16x1xi1> to vector<16x32xi1>
    %14 = vector.broadcast %cst : f32 to vector<16x32xf32>
    %15 = arith.select %13, %6, %14 : vector<16x32xi1>, vector<16x32xf32>
    %c0_3 = arith.constant 0 : index
    %c0_4 = arith.constant 0 : index
    %16 = vector.load %arg3[%c0_3, %c0_4] : memref<8x32xf32, #tpu.memory_space<vmem>>, vector<1x32xf32>
    %cst_5 = arith.constant dense<0.000000e+00> : vector<32xf32>
    %17 = vector.multi_reduction <add>, %15, %cst_5 [0] : vector<16x32xf32> to vector<32xf32>
    %18 = vector.shape_cast %17 : vector<32xf32> to vector<1x32xf32>
    %19 = arith.addf %16, %18 : vector<1x32xf32>
    %c0_6 = arith.constant 0 : index
    %c0_7 = arith.constant 0 : index
    %20 = vector.load %arg3[%c0_6, %c0_7] : memref<8x32xf32, #tpu.memory_space<vmem>>, vector<1x32xf32>
    tpu.vector_store %arg3[%c0_6, %c0_7], %19 {strides = array<i32>} : memref<8x32xf32, #tpu.memory_space<vmem>>, vector<1x32xf32>,
    %c0_8 = arith.constant 0 : index
    %c0_9 = arith.constant 0 : index
    %21 = vector.load %arg4[%c0_8, %c0_9] : memref<8x32xf32, #tpu.memory_space<vmem>>, vector<1x32xf32>
    %22 = arith.mulf %15, %15 : vector<16x32xf32>
    %cst_10 = arith.constant dense<0.000000e+00> : vector<32xf32>
    %23 = vector.multi_reduction <add>, %22, %cst_10 [0] : vector<16x32xf32> to vector<32xf32>
    %24 = vector.shape_cast %23 : vector<32xf32> to vector<1x32xf32>
    %25 = arith.addf %21, %24 : vector<1x32xf32>
    %c0_11 = arith.constant 0 : index
    %c0_12 = arith.constant 0 : index
    %26 = vector.load %arg4[%c0_11, %c0_12] : memref<8x32xf32, #tpu.memory_space<vmem>>, vector<1x32xf32>
    tpu.vector_store %arg4[%c0_11, %c0_12], %25 {strides = array<i32>} : memref<8x32xf32, #tpu.memory_space<vmem>>, vector<1x32xf32>,
    return
  }
  func.func @transform_0(%arg0: i32, %arg1: i32) -> (i32, i32) {
    %c1_i32 = arith.constant 1 : i32
    %0 = arith.muli %arg0, %c1_i32 : i32
    %1 = arith.addi %0, %arg1 : i32
    %c0_i32 = arith.constant 0 : i32
    %2 = arith.minsi %1, %c0_i32 : i32
    %c0_i32_0 = arith.constant 0 : i32
    %c0_i32_1 = arith.constant 0 : i32
    return %2, %c0_i32_0 : i32, i32
  }
  func.func @transform_1(%arg0: i32, %arg1: i32) -> (i32, i32) {
    %c0_i32 = arith.constant 0 : i32
    %c0_i32_0 = arith.constant 0 : i32
    return %arg0, %c0_i32 : i32, i32
  }
  func.func @transform_2(%arg0: i32, %arg1: i32) -> (i32, i32) {
    %c0_i32 = arith.constant 0 : i32
    %c0_i32_0 = arith.constant 0 : i32
    return %arg0, %c0_i32 : i32, i32
  }
}

</mosaic_0001>

<llo_original>
// kernel: tpu_custom_call.1
$region0: #{tpu_custom_call.1}
  #allocation0 [shape = 'u32[]', space=smem, size = 0x4, offset = 0x4, fixed_abs, tag = 'smem constant byte address 0x4 - core index']
  #allocation1 [shape = 'u32[144,128]{1,0:T(1,128)}', space=vmem, size = 0x12000, scoped, tag = 'internal scratch']
  %s0 = inlined_call_operand.hbm [shape: f32[16,32], index: 0, kind: input, shape index: {}]
  %s1 = inlined_call_operand.hbm [shape: f32[8,32], index: 1, kind: output, shape index: {0}]
  %s2 = inlined_call_operand.hbm [shape: f32[8,32], index: 2, kind: output, shape index: {1}]
  %3 = xla_tuple %s1, %s2
  %s4 = sld [smem:[#allocation0]]
  $region30: #{tpu_custom_call.1} parent=0
    _
  %s6 = ssub.s32 1, %s4
  %s7 = scalar_select 0, %s6, %s4
  $region1: #{tpu_custom_call.1} parent=0
    #allocation2 [shape = 'u8[8192]{0}', space=vmem, size = 0x2000, scoped, tag = 'input window, operand 0, single buffered']
    #allocation3 [shape = 's32[1]{0}', space=sflag, size = 0x4, scoped, tag = 'scoped memory for tpu_custom_call.1']
    #allocation4 [shape = 's32[1]{0}', space=sflag, size = 0x4, scoped, tag = 'scoped memory for tpu_custom_call.1']
    #allocation5 [shape = 'u8[4096]{0}', space=vmem, size = 0x1000, scoped, tag = 'output window, operand 0, single buffered']
    #allocation6 [shape = 'u8[4096]{0}', space=vmem, size = 0x1000, scoped, tag = 'output window, operand 1, single buffered']
    #allocation7 [shape = 's32[1]{0}', space=sflag, size = 0x4, scoped, tag = 'scoped memory for tpu_custom_call.1']
    %8 = vsyncpa [#allocation3], 0
    %9 = vsyncpa [#allocation4], 0
    %10 = vsyncpa [#allocation7], 0
    // Predicated region
    $region2: #{tpu_custom_call.1} parent=1 // pred_check
      _
    $region3: #{tpu_custom_call.1} parent=1 // pred_check_branch
      %12 = sbr.rel (0) target = $region5
    $region4: #{tpu_custom_call.1} parent=1 // pred_region
      %s13 = sadd.s32 0, 0
      %p14 = scmp.lt.s32.totalorder %s13, 0
      %s15 = scalar_select %p14, %s13, 0
      %s16 = smul.u32 2, %s15
      %s18 = ssub.s32 256, 256
      %19 = vsyncadd [#allocation3], %s18
      %s20 = smul.addr %s16, 128
      %s21 = scalar_lea.hbm %s0, %s20
      %s22 = sshll.u32 [#allocation2], 4
      %s23 = int_to_ptr.vmem [resolvable:$true] %s22
      %28 = dma.hbm_to_vmem [thread:$0]  %s21, 256, %s23, [#allocation3], 128, 128, 8
    $region5: #{tpu_custom_call.1} parent=1 // pred_fallthru
      _
    // Predicated region
    $region6: #{tpu_custom_call.1} parent=1 // pred_check
      _
    $region7: #{tpu_custom_call.1} parent=1 // pred_check_branch
      %30 = sbr.rel (0) target = $region9
    $region8: #{tpu_custom_call.1} parent=1 // pred_region
      %31 = dma.done [#allocation3], 256
    $region9: #{tpu_custom_call.1} parent=1 // pred_fallthru
      _
    %s32 = sadd.s32 0, 0
    %p33 = scmp.lt.s32.totalorder %s32, 0
    %s34 = scalar_select %p33, %s32, 0
    %s35 = smul.u32 2, %s34
    %p36 = scmp.eq.s32.totalorder 0, 0
    // Predicated region
    $region10: #{tpu_custom_call.1} parent=1 // pred_check
      %p37 = pneg %p36
    $region11: #{tpu_custom_call.1} parent=1 // pred_check_branch
      %39 = sbr.rel (%p37) target = $region13
    $region12: #{tpu_custom_call.1} parent=1 // pred_region
      %vm40 = vcmask 261120
      %41 = vst.msk [vmem:[#allocation5] sm:$0xff] %vm40, 0.0
      %42 = vst.msk [vmem:[#allocation6] sm:$0xff] %vm40, 0.0
    $region13: #{tpu_custom_call.1} parent=1 // pred_fallthru
      _
    %s43 = sadd.s32 0, 0
    %s44 = smul.u32 %s43, 16
    %v45 = vld [vmem:[#allocation2] sm:$0xff]
    %v46 = vld [vmem:[#allocation2 + $0x8] sm:$0xff]
    %v47 = vlaneseq
    %v48 = vshrl.u32 %v47, 7
    %v49 = vadd.s32 %v48, 8
    %v50 = vstv %s44
    %v51 = vadd.s32 %v48, %v50
    %v52 = vadd.s32 %v49, %v50
    %vm53 = vcmp.lt.s32.totalorder %v51, 16
    %vm54 = vcmp.lt.s32.totalorder %v52, 16
    %v55 = vsel %vm53, 1, 0
    %v56 = vsel %vm54, 1, 0
    %vm57 = vcmp.eq.s32.totalorder %v55, 1
    %vm58 = vcmp.eq.s32.totalorder %v56, 1
    %v59 = vsel %vm57, %v45, 0.0
    %v60 = vsel %vm58, %v46, 0.0
    %v61 = vld [vmem:[#allocation5] sm:$0x1]
    %vm62 = vcmask 261120
    %v63 = vsel %vm62, %v59, 0.0
    %v64 = vsel %vm62, %v60, 0.0
    %v65 = vadd.f32 %v63, %v64
    %v66 = vrot.slane %v65, 4
    %v67 = vadd.f32 %v65, %v66
    %v68 = vrot.slane %v67, 2
    %v69 = vadd.f32 %v67, %v68
    %v70 = vrot.slane %v69, 1
    %v71 = vadd.f32 %v69, %v70
    %v72 = vadd.f32 %v61, %v71
    %vm73 = vcmask 253952
    %74 = vst.msk [vmem:[#allocation5] sm:$0x1] %vm73, %v72
    %v75 = vld [vmem:[#allocation6] sm:$0x1]
    %v76 = vmul.f32 %v59, %v59
    %v77 = vmul.f32 %v60, %v60
    %v78 = vsel %vm62, %v76, 0.0
    %v79 = vsel %vm62, %v77, 0.0
    %v80 = vadd.f32 %v78, %v79
    %v81 = vrot.slane %v80, 4
    %v82 = vadd.f32 %v80, %v81
    %v83 = vrot.slane %v82, 2
    %v84 = vadd.f32 %v82, %v83
    %v85 = vrot.slane %v84, 1
    %v86 = vadd.f32 %v84, %v85
    %v87 = vadd.f32 %v75, %v86
    %88 = vst.msk [vmem:[#allocation6] sm:$0x1] %vm73, %v87
    // Predicated region
    $region14: #{tpu_custom_call.1} parent=1 // pred_check
      _
    $region15: #{tpu_custom_call.1} parent=1 // pred_check_branch
      %90 = sbr.rel (0) target = $region17
    $region16: #{tpu_custom_call.1} parent=1 // pred_region
      %s92 = ssub.s32 128, 128
      %93 = vsyncadd [#allocation4], %s92
      %s95 = sshll.u32 [#allocation5], 4
      %s96 = int_to_ptr.vmem [resolvable:$true] %s95
      %98 = dma.vmem_to_hbm [thread:$0]  %s96, 128, %s1, [#allocation4]
    $region17: #{tpu_custom_call.1} parent=1 // pred_fallthru
      _
    // Predicated region
    $region18: #{tpu_custom_call.1} parent=1 // pred_check
      _
    $region19: #{tpu_custom_call.1} parent=1 // pred_check_branch
      %100 = sbr.rel (0) target = $region21
    $region20: #{tpu_custom_call.1} parent=1 // pred_region
      %s102 = ssub.s32 128, 128
      %103 = vsyncadd [#allocation7], %s102
      %s105 = sshll.u32 [#allocation6], 4
      %s106 = int_to_ptr.vmem [resolvable:$true] %s105
      %108 = dma.vmem_to_hbm [thread:$0]  %s106, 128, %s2, [#allocation7]
    $region21: #{tpu_custom_call.1} parent=1 // pred_fallthru
      _
    // Predicated region
    $region22: #{tpu_custom_call.1} parent=1 // pred_check
      _
    $region23: #{tpu_custom_call.1} parent=1 // pred_check_branch
      %110 = sbr.rel (0) target = $region25
    $region24: #{tpu_custom_call.1} parent=1 // pred_region
      %111 = dma.done [#allocation4], 128
    $region25: #{tpu_custom_call.1} parent=1 // pred_fallthru
      _
    // Predicated region
    $region26: #{tpu_custom_call.1} parent=1 // pred_check
      _
    $region27: #{tpu_custom_call.1} parent=1 // pred_check_branch
      %113 = sbr.rel (0) target = $region29
    $region28: #{tpu_custom_call.1} parent=1 // pred_region
      %114 = dma.done [#allocation7], 128
    $region29: #{tpu_custom_call.1} parent=1 // pred_fallthru
      _
    %115 = vsyncpa [#allocation3], 1
    %116 = vsyncpa [#allocation4], 1
    %117 = vsyncpa [#allocation7], 1

</llo_original>
